<compile_context>
chip_gen: v7x
topology: tpu7x:2x2x1
jax: 0.10.0
libtpu: 0.0.40
codegen_flags: <defaults>
</compile_context>

<pallas_src>
import jax
import jax.numpy as jnp
from jax import lax
from jax.experimental import pallas as pl
from jax.experimental.pallas import tpu as pltpu

# Sobel filters from the module's __init__ (used by the pure-JAX reference
# check; the kernel uses their separable factorisation).
SOBEL_X = ((1.0, 0.0, -1.0),
           (2.0, 0.0, -2.0),
           (1.0, 0.0, -1.0))
SOBEL_Y = ((1.0, 2.0, 1.0),
           (0.0, 0.0, 0.0),
           (-1.0, -2.0, -1.0))


def _grad_loss_kernel(out_ref, gt_ref, sum_ref, acc_ref):
    """One grid step processes P (batch*channel) planes of shape (H, W).

    out_ref / gt_ref : (P, H, W)  unpadded input blocks, native dtype
    sum_ref          : (1, 1, 1)  per-outer-slice scalar accumulator (output)
    acc_ref          : (H, W)     f32 running elementwise |grad| accumulator
    """
    P, H, W = out_ref.shape

    @pl.when(pl.program_id(1) == 0)
    def _init():
        acc_ref[...] = jnp.zeros_like(acc_ref)
        sum_ref[...] = jnp.zeros_like(sum_ref)

    # Border masks implementing the zero halo of F.conv2d(..., padding=1).
    row = lax.broadcasted_iota(jnp.int32, (H, W), 0)
    col = lax.broadcasted_iota(jnp.int32, (H, W), 1)
    top, bot = row == 0, row == H - 1
    lft, rgt = col == 0, col == W - 1

    def plane(p, acc):
        # Conv linearity: Sobel(out) - Sobel(gt) == Sobel(out - gt).
        d = out_ref[p].astype(jnp.float32) - gt_ref[p].astype(jnp.float32)

        # Shifted taps built in-register (XLU roll + VPU mask); positive shifts
        # only (a shift of N-1 is the same full rotation as a shift of -1).
        d_up = jnp.where(top, 0.0, pltpu.roll(d, shift=1, axis=0))        # d[i-1, j]
        d_dn = jnp.where(bot, 0.0, pltpu.roll(d, shift=H - 1, axis=0))    # d[i+1, j]

        # Separable Sobel, vertical pass:
        #   X = [1,2,1]^T (smooth) (x) [1,0,-1]   Y = [1,0,-1]^T (diff) (x) [1,2,1]
        rows_sum = d_up + 2.0 * d + d_dn
        rows_diff = d_up - d_dn

        # Horizontal pass (lane-direction rolls).
        rs_l = jnp.where(lft, 0.0, pltpu.roll(rows_sum, shift=1, axis=1))      # [i, j-1]
        rs_r = jnp.where(rgt, 0.0, pltpu.roll(rows_sum, shift=W - 1, axis=1))  # [i, j+1]
        rd_l = jnp.where(lft, 0.0, pltpu.roll(rows_diff, shift=1, axis=1))
        rd_r = jnp.where(rgt, 0.0, pltpu.roll(rows_diff, shift=W - 1, axis=1))

        gx = rs_l - rs_r                       # Sobel-X response on the diff
        gy = rd_l + 2.0 * rows_diff + rd_r     # Sobel-Y response on the diff
        return acc + jnp.abs(gx) + jnp.abs(gy)

    # Deferred reduction: cheap elementwise accumulate per plane / per step;
    # the expensive cross-lane reduce runs once, on the last reduction step.
    acc_ref[...] += lax.fori_loop(0, P, plane, jnp.zeros((H, W), jnp.float32))

    @pl.when(pl.program_id(1) == pl.num_programs(1) - 1)
    def _finalize():
        sum_ref[...] += jnp.sum(acc_ref[...])


def _round_up(x, m):
    return ((x + m - 1) // m) * m


def _padded_plane_bytes(h, w, itemsize):
    """VMEM footprint of one (h, w) plane including (sublane, 128-lane) padding."""
    sublane = 8 * max(1, 4 // itemsize)          # f32: 8, bf16: 16, int8: 32
    return _round_up(h, sublane) * _round_up(w, 128) * itemsize


def _vmem_capacity_bytes():
    try:
        return int(pltpu.get_tpu_info().vmem_capacity_bytes)
    except Exception:
        return 64 << 20                          # conservative (v7x per-core VMEM)


def _num_tensorcores():
    """2 on multi-TensorCore chips (v7x-class); 1 on single-TC v5e / v6e."""
    try:
        kind = jax.devices()[0].device_kind.lower()
    except Exception:
        return 1
    return 2 if ("v7" in kind or "7x" in kind) else 1


def _choose_planes_per_step(bc, h, w, itemsize, budget_bytes):
    """Largest plane count per grid step whose VMEM footprint fits the budget.

    Counts the 2 inputs x 2 pipeline buffers of tile-padded input blocks plus
    the f32 per-plane loop temporaries and the (h, w) accumulator scratch.
    """
    per_plane = 4 * _padded_plane_bytes(h, w, itemsize)   # 2 inputs x double buffer
    fixed = 10 * _padded_plane_bytes(h, w, 4)             # f32 temps + acc scratch
    max_p = (budget_bytes - fixed) // max(per_plane, 1)
    p = int(max(1, min(bc, max_p)))
    return p, p * per_plane + fixed


def gradient_loss(output, gt, loss_weight=1.0):
    """Pallas implementation of Gradient_Loss.forward. Inputs are NCHW."""
    assert output.shape == gt.shape
    b, c, h, w = output.shape
    bc = b * c

    # (b, c, h, w) -> (b*c, h, w): free reshape.  No host-side pad, no upcast.
    op = output.reshape(bc, h, w)
    gp = gt.reshape(bc, h, w)

    vmem_cap = _vmem_capacity_bytes()
    budget = min(24 << 20, vmem_cap // 4)        # ~24 MiB v5e/v6e, ~16 MiB v7x
    ncore = _num_tensorcores()

    P, est_bytes = _choose_planes_per_step(
        bc, h, w, jnp.dtype(output.dtype).itemsize, budget)
    P = min(P, max(1, pl.cdiv(bc, ncore)))       # keep both cores busy for small bc

    # Non-divisor plane counts: zero-pad the plane axis (Sobel(0) == 0, so the
    # padded planes contribute nothing to the sum).
    total = _round_up(bc, P * ncore)
    if total != bc:
        op = jnp.pad(op, ((0, total - bc), (0, 0), (0, 0)))
        gp = jnp.pad(gp, ((0, total - bc), (0, 0), (0, 0)))
    inner = total // (P * ncore)

    plane_spec = pl.BlockSpec((P, h, w), lambda cc, i: (cc * inner + i, 0, 0))
    out_spec = pl.BlockSpec((1, 1, 1), lambda cc, i: (cc, 0, 0))

    # Keep the scoped VMEM limit above both the block footprint and the
    # per-generation default so it never silently caps the block size.
    vmem_limit = int(min(vmem_cap // 2, max(est_bytes + (8 << 20), 32 << 20)))

    partials = pl.pallas_call(
        _grad_loss_kernel,
        out_shape=jax.ShapeDtypeStruct((ncore, 1, 1), jnp.float32),
        grid_spec=pltpu.PrefetchScalarGridSpec(
            num_scalar_prefetch=0,
            grid=(ncore, inner),
            in_specs=[plane_spec, plane_spec],
            out_specs=out_spec,
            scratch_shapes=[pltpu.VMEM((h, w), jnp.float32)],
        ),
        compiler_params=pltpu.CompilerParams(
            dimension_semantics=("parallel", "arbitrary"),
            vmem_limit_bytes=vmem_limit),
    )(op, gp)

    n = b * c * h * w
    # mean|X(out)-X(gt)| + mean|Y(out)-Y(gt)| == (sum|X(d)| + sum|Y(d)|) / n
    return loss_weight * jnp.sum(partials) / n


def _reference_jax(output, gt, loss_weight=1.0):
    """Pure-JAX reference (mirrors the torch forward) for a sanity check."""
    kx = jnp.asarray(SOBEL_X, jnp.float32).reshape(1, 1, 3, 3)
    ky = jnp.asarray(SOBEL_Y, jnp.float32).reshape(1, 1, 3, 3)
    b, c, h, w = output.shape

    def conv(x, k):
        return jax.lax.conv_general_dilated(
            x, k, window_strides=(1, 1), padding=((1, 1), (1, 1)),
            dimension_numbers=("NCHW", "OIHW", "NCHW"))

    ox = jnp.concatenate([conv(output[:, i:i + 1], kx) for i in range(c)], axis=1)
    oy = jnp.concatenate([conv(output[:, i:i + 1], ky) for i in range(c)], axis=1)
    gx = jnp.concatenate([conv(gt[:, i:i + 1], kx) for i in range(c)], axis=1)
    gy = jnp.concatenate([conv(gt[:, i:i + 1], ky) for i in range(c)], axis=1)
    return loss_weight * (jnp.mean(jnp.abs(ox - gx)) + jnp.mean(jnp.abs(oy - gy)))


if __name__ == "__main__":
    key = jax.random.PRNGKey(0)
    k1, k2 = jax.random.split(key)
    b, c, h, w = 2, 4, 16, 16
    output = jax.random.normal(k1, (b, c, h, w), dtype=jnp.float32)
    gt = jax.random.normal(k2, (b, c, h, w), dtype=jnp.float32)

    loss = gradient_loss(output, gt, loss_weight=1.0)
    jax.block_until_ready(loss)

    ref = _reference_jax(output, gt, loss_weight=1.0)
    assert jnp.allclose(loss, ref, rtol=1e-5, atol=1e-5), (loss, ref)

    print("KERNEL_OK")
</pallas_src>

<mosaic_0001>
module attributes {stable_mosaic.version = 11 : i64} {
  func.func @_grad_loss_kernel(%arg0: i32, %arg1: i32, %arg2: memref<8x16x16xf32, #tpu.memory_space<vmem>>, %arg3: memref<8x16x16xf32, #tpu.memory_space<vmem>>, %arg4: memref<1x1x1xf32, #tpu.memory_space<vmem>>, %arg5: memref<16x16xf32, #tpu.memory_space<vmem>>) attributes {dimension_semantics = [#tpu.dimension_semantics<parallel>, #tpu.dimension_semantics<arbitrary>], iteration_bounds = array<i64: 1, 1>, scalar_prefetch = 0 : i64, scratch_operands = 1 : i64, tpu.core_type = #tpu.core_type<tc>, window_params = [{transform_indices = @transform_0, window_bounds = array<i64: 8, 16, 16>}, {transform_indices = @transform_1, window_bounds = array<i64: 8, 16, 16>}, {transform_indices = @transform_2, window_bounds = array<i64: 1, 1, 1>}]} {
    %c0_i32 = arith.constant 0 : i32
    %0 = arith.cmpi eq, %arg1, %c0_i32 : i32
    %1 = arith.extui %0 : i1 to i32
    %c0_i32_0 = arith.constant 0 : i32
    %2 = arith.cmpi ne, %1, %c0_i32_0 : i32
    scf.if %2 {
      %cst_11 = arith.constant 0.000000e+00 : f32
      %22 = vector.broadcast %cst_11 : f32 to vector<16x16xf32>
      %c0_12 = arith.constant 0 : index
      %c0_13 = arith.constant 0 : index
      %23 = vector.load %arg5[%c0_12, %c0_13] : memref<16x16xf32, #tpu.memory_space<vmem>>, vector<16x16xf32>
      tpu.vector_store %arg5[%c0_12, %c0_13], %22 {strides = array<i32>} : memref<16x16xf32, #tpu.memory_space<vmem>>, vector<16x16xf32>,
      %cst_14 = arith.constant 0.000000e+00 : f32
      %24 = vector.broadcast %cst_14 : f32 to vector<1x1x1xf32>
      %c0_15 = arith.constant 0 : index
      %c0_16 = arith.constant 0 : index
      %c0_17 = arith.constant 0 : index
      %25 = vector.load %arg4[%c0_15, %c0_16, %c0_17] : memref<1x1x1xf32, #tpu.memory_space<vmem>>, vector<1x1x1xf32>
      tpu.vector_store %arg4[%c0_15, %c0_16, %c0_17], %24 {strides = array<i32>} : memref<1x1x1xf32, #tpu.memory_space<vmem>>, vector<1x1x1xf32>,
    } else {
    }
    %3 = tpu.iota {dimensions = array<i32: 0>} : vector<16x16xi32>
    %4 = tpu.iota {dimensions = array<i32: 1>} : vector<16x16xi32>
    %c0_i32_1 = arith.constant 0 : i32
    %5 = vector.broadcast %c0_i32_1 : i32 to vector<16x16xi32>
    %6 = arith.cmpi eq, %3, %5 : vector<16x16xi32>
    %c15_i32 = arith.constant 15 : i32
    %7 = vector.broadcast %c15_i32 : i32 to vector<16x16xi32>
    %8 = arith.cmpi eq, %3, %7 : vector<16x16xi32>
    %c0_i32_2 = arith.constant 0 : i32
    %9 = vector.broadcast %c0_i32_2 : i32 to vector<16x16xi32>
    %10 = arith.cmpi eq, %4, %9 : vector<16x16xi32>
    %c15_i32_3 = arith.constant 15 : i32
    %11 = vector.broadcast %c15_i32_3 : i32 to vector<16x16xi32>
    %12 = arith.cmpi eq, %4, %11 : vector<16x16xi32>
    %c0 = arith.constant 0 : index
    %c0_4 = arith.constant 0 : index
    %13 = vector.load %arg5[%c0, %c0_4] : memref<16x16xf32, #tpu.memory_space<vmem>>, vector<16x16xf32>
    %cst = arith.constant 0.000000e+00 : f32
    %14 = vector.broadcast %cst : f32 to vector<16x16xf32>
    %c0_i32_5 = arith.constant 0 : i32
    %c8_i32 = arith.constant 8 : i32
    %15 = arith.addi %c0_i32_5, %c8_i32 : i32
    %c1_i32 = arith.constant 1 : i32
    %16 = scf.for %arg6 = %c0_i32_5 to %15 step %c1_i32 iter_args(%arg7 = %14) -> (vector<16x16xf32>)  : i32 {
      %22 = arith.index_cast %arg6 : i32 to index
      %c0_11 = arith.constant 0 : index
      %c0_12 = arith.constant 0 : index
      %23 = vector.load %arg2[%22, %c0_11, %c0_12] : memref<8x16x16xf32, #tpu.memory_space<vmem>>, vector<1x16x16xf32>
      %24 = vector.shape_cast %23 : vector<1x16x16xf32> to vector<16x16xf32>
      %25 = arith.index_cast %arg6 : i32 to index
      %c0_13 = arith.constant 0 : index
      %c0_14 = arith.constant 0 : index
      %26 = vector.load %arg3[%25, %c0_13, %c0_14] : memref<8x16x16xf32, #tpu.memory_space<vmem>>, vector<1x16x16xf32>
      %27 = vector.shape_cast %26 : vector<1x16x16xf32> to vector<16x16xf32>
      %28 = arith.subf %24, %27 : vector<16x16xf32>
      %c1_i32_15 = arith.constant 1 : i32
      %29 = tpu.dynamic_rotate %28 by %c1_i32_15 dim 0 : vector<16x16xf32>, i32 -> vector<16x16xf32>
      %cst_16 = arith.constant 0.000000e+00 : f32
      %30 = vector.broadcast %cst_16 : f32 to vector<16x16xf32>
      %31 = arith.select %6, %30, %29 : vector<16x16xi1>, vector<16x16xf32>
      %c15_i32_17 = arith.constant 15 : i32
      %32 = tpu.dynamic_rotate %28 by %c15_i32_17 dim 0 : vector<16x16xf32>, i32 -> vector<16x16xf32>
      %cst_18 = arith.constant 0.000000e+00 : f32
      %33 = vector.broadcast %cst_18 : f32 to vector<16x16xf32>
      %34 = arith.select %8, %33, %32 : vector<16x16xi1>, vector<16x16xf32>
      %cst_19 = arith.constant 2.000000e+00 : f32
      %35 = vector.broadcast %cst_19 : f32 to vector<16x16xf32>
      %36 = arith.mulf %35, %28 : vector<16x16xf32>
      %37 = arith.addf %31, %36 : vector<16x16xf32>
      %38 = arith.addf %37, %34 : vector<16x16xf32>
      %39 = arith.subf %31, %34 : vector<16x16xf32>
      %c1_i32_20 = arith.constant 1 : i32
      %40 = tpu.dynamic_rotate %38 by %c1_i32_20 dim 1 : vector<16x16xf32>, i32 -> vector<16x16xf32>
      %cst_21 = arith.constant 0.000000e+00 : f32
      %41 = vector.broadcast %cst_21 : f32 to vector<16x16xf32>
      %42 = arith.select %10, %41, %40 : vector<16x16xi1>, vector<16x16xf32>
      %c15_i32_22 = arith.constant 15 : i32
      %43 = tpu.dynamic_rotate %38 by %c15_i32_22 dim 1 : vector<16x16xf32>, i32 -> vector<16x16xf32>
      %cst_23 = arith.constant 0.000000e+00 : f32
      %44 = vector.broadcast %cst_23 : f32 to vector<16x16xf32>
      %45 = arith.select %12, %44, %43 : vector<16x16xi1>, vector<16x16xf32>
      %c1_i32_24 = arith.constant 1 : i32
      %46 = tpu.dynamic_rotate %39 by %c1_i32_24 dim 1 : vector<16x16xf32>, i32 -> vector<16x16xf32>
      %cst_25 = arith.constant 0.000000e+00 : f32
      %47 = vector.broadcast %cst_25 : f32 to vector<16x16xf32>
      %48 = arith.select %10, %47, %46 : vector<16x16xi1>, vector<16x16xf32>
      %c15_i32_26 = arith.constant 15 : i32
      %49 = tpu.dynamic_rotate %39 by %c15_i32_26 dim 1 : vector<16x16xf32>, i32 -> vector<16x16xf32>
      %cst_27 = arith.constant 0.000000e+00 : f32
      %50 = vector.broadcast %cst_27 : f32 to vector<16x16xf32>
      %51 = arith.select %12, %50, %49 : vector<16x16xi1>, vector<16x16xf32>
      %52 = arith.subf %42, %45 : vector<16x16xf32>
      %cst_28 = arith.constant 2.000000e+00 : f32
      %53 = vector.broadcast %cst_28 : f32 to vector<16x16xf32>
      %54 = arith.mulf %53, %39 : vector<16x16xf32>
      %55 = arith.addf %48, %54 : vector<16x16xf32>
      %56 = arith.addf %55, %51 : vector<16x16xf32>
      %57 = math.absf %52 : vector<16x16xf32>
      %58 = arith.addf %arg7, %57 : vector<16x16xf32>
      %59 = math.absf %56 : vector<16x16xf32>
      %60 = arith.addf %58, %59 : vector<16x16xf32>
      scf.yield %60 : vector<16x16xf32>
    }
    %c8_i32_6 = arith.constant 8 : i32
    %17 = arith.addf %13, %16 : vector<16x16xf32>
    %c0_7 = arith.constant 0 : index
    %c0_8 = arith.constant 0 : index
    %18 = vector.load %arg5[%c0_7, %c0_8] : memref<16x16xf32, #tpu.memory_space<vmem>>, vector<16x16xf32>
    tpu.vector_store %arg5[%c0_7, %c0_8], %17 {strides = array<i32>} : memref<16x16xf32, #tpu.memory_space<vmem>>, vector<16x16xf32>,
    %c0_i32_9 = arith.constant 0 : i32
    %19 = arith.cmpi eq, %arg1, %c0_i32_9 : i32
    %20 = arith.extui %19 : i1 to i32
    %c0_i32_10 = arith.constant 0 : i32
    %21 = arith.cmpi ne, %20, %c0_i32_10 : i32
    scf.if %21 {
      %c0_11 = arith.constant 0 : index
      %c0_12 = arith.constant 0 : index
      %c0_13 = arith.constant 0 : index
      %22 = vector.load %arg4[%c0_11, %c0_12, %c0_13] : memref<1x1x1xf32, #tpu.memory_space<vmem>>, vector<1x1x1xf32>
      %c0_14 = arith.constant 0 : index
      %c0_15 = arith.constant 0 : index
      %23 = vector.load %arg5[%c0_14, %c0_15] : memref<16x16xf32, #tpu.memory_space<vmem>>, vector<16x16xf32>
      %24 = vector.shape_cast %23 : vector<16x16xf32> to vector<1x16x16xf32>
      %cst_16 = arith.constant dense<0.000000e+00> : vector<1xf32>
      %25 = vector.multi_reduction <add>, %24, %cst_16 [1, 2] : vector<1x16x16xf32> to vector<1xf32>
      %26 = vector.shape_cast %25 : vector<1xf32> to vector<1x1x1xf32>
      %27 = vector.extract %26[0, 0, 0] : f32 from vector<1x1x1xf32>
      %28 = vector.broadcast %27 : f32 to vector<1x1x1xf32>
      %29 = arith.addf %22, %28 : vector<1x1x1xf32>
      %c0_17 = arith.constant 0 : index
      %c0_18 = arith.constant 0 : index
      %c0_19 = arith.constant 0 : index
      %30 = vector.load %arg4[%c0_17, %c0_18, %c0_19] : memref<1x1x1xf32, #tpu.memory_space<vmem>>, vector<1x1x1xf32>
      tpu.vector_store %arg4[%c0_17, %c0_18, %c0_19], %29 {strides = array<i32>} : memref<1x1x1xf32, #tpu.memory_space<vmem>>, vector<1x1x1xf32>,
    } else {
    }
    return
  }
  func.func @transform_0(%arg0: i32, %arg1: i32) -> (i32, i32, i32) {
    %c1_i32 = arith.constant 1 : i32
    %0 = arith.muli %arg0, %c1_i32 : i32
    %1 = arith.addi %0, %arg1 : i32
    %c0_i32 = arith.constant 0 : i32
    %c0_i32_0 = arith.constant 0 : i32
    %c0_i32_1 = arith.constant 0 : i32
    return %1, %c0_i32, %c0_i32_0 : i32, i32, i32
  }
  func.func @transform_1(%arg0: i32, %arg1: i32) -> (i32, i32, i32) {
    %c1_i32 = arith.constant 1 : i32
    %0 = arith.muli %arg0, %c1_i32 : i32
    %1 = arith.addi %0, %arg1 : i32
    %c0_i32 = arith.constant 0 : i32
    %c0_i32_0 = arith.constant 0 : i32
    %c0_i32_1 = arith.constant 0 : i32
    return %1, %c0_i32, %c0_i32_0 : i32, i32, i32
  }
  func.func @transform_2(%arg0: i32, %arg1: i32) -> (i32, i32, i32) {
    %c0_i32 = arith.constant 0 : i32
    %c0_i32_0 = arith.constant 0 : i32
    %c0_i32_1 = arith.constant 0 : i32
    return %arg0, %c0_i32, %c0_i32_0 : i32, i32, i32
  }
}

</mosaic_0001>

<llo_original>
// kernel: tpu_custom_call.1
$region0: #{tpu_custom_call.1}
  #allocation0 [shape = 'u32[]', space=smem, size = 0x4, offset = 0x4, fixed_abs, tag = 'smem constant byte address 0x4 - core index']
  #allocation1 [shape = 'u32[144,128]{1,0:T(1,128)}', space=vmem, size = 0x12000, scoped, tag = 'internal scratch']
  #allocation2 [shape = 'f32[16,16]{1,0:T(8,128)}', space=vmem, size = 0x2000, scoped, tag = 'scratch operand']
  %s0 = inlined_call_operand.hbm [shape: f32[8,16,16], index: 0, kind: input, shape index: {}]
  %s1 = inlined_call_operand.hbm [shape: f32[8,16,16], index: 1, kind: input, shape index: {}]
  %s2 = inlined_call_operand.hbm [shape: f32[1,1,1], index: 2, kind: output, shape index: {}]
  %s3 = sld [smem:[#allocation0]]
  $region41: #{tpu_custom_call.1} parent=0
    _
  %s5 = ssub.s32 1, %s3
  %s6 = scalar_select 0, %s5, %s3
  $region1: #{tpu_custom_call.1} parent=0
    #allocation3 [shape = 'u8[65536]{0}', space=vmem, size = 0x10000, scoped, tag = 'input window, operand 0, single buffered']
    #allocation4 [shape = 's32[1]{0}', space=sflag, size = 0x4, scoped, tag = 'scoped memory for tpu_custom_call.1']
    #allocation5 [shape = 's32[1]{0}', space=sflag, size = 0x4, scoped, tag = 'scoped memory for tpu_custom_call.1']
    #allocation6 [shape = 'u8[65536]{0}', space=vmem, size = 0x10000, scoped, tag = 'input window, operand 1, single buffered']
    #allocation7 [shape = 's32[1]{0}', space=sflag, size = 0x4, scoped, tag = 'scoped memory for tpu_custom_call.1']
    #allocation8 [shape = 'u8[512]{0}', space=vmem, size = 0x400, scoped, tag = 'output window, operand 0, single buffered']
    %7 = vsyncpa [#allocation4], 0
    %8 = vsyncpa [#allocation7], 0
    %9 = vsyncpa [#allocation5], 0
    // Predicated region
    $region2: #{tpu_custom_call.1} parent=1 // pred_check
      _
    $region3: #{tpu_custom_call.1} parent=1 // pred_check_branch
      %11 = sbr.rel (0) target = $region5
    $region4: #{tpu_custom_call.1} parent=1 // pred_region
      %s12 = sadd.s32 0, 0
      %s13 = smul.u32 8, %s12
      %s15 = ssub.s32 2048, 2048
      %16 = vsyncadd [#allocation4], %s15
      %s17 = smul.addr %s13, 2
      %s18 = smul.addr %s17, 128
      %s19 = scalar_lea.hbm %s0, %s18
      %s20 = sshll.u32 [#allocation3], 4
      %s21 = int_to_ptr.vmem [resolvable:$true] %s20
      %26 = dma.hbm_to_vmem [thread:$0]  %s19, 2048, %s21, [#allocation4], 128, 128, 8
    $region5: #{tpu_custom_call.1} parent=1 // pred_fallthru
      _
    // Predicated region
    $region6: #{tpu_custom_call.1} parent=1 // pred_check
      _
    $region7: #{tpu_custom_call.1} parent=1 // pred_check_branch
      %28 = sbr.rel (0) target = $region9
    $region8: #{tpu_custom_call.1} parent=1 // pred_region
      %s29 = sadd.s32 0, 0
      %s30 = smul.u32 8, %s29
      %s32 = ssub.s32 2048, 2048
      %33 = vsyncadd [#allocation7], %s32
      %s34 = smul.addr %s30, 2
      %s35 = smul.addr %s34, 128
      %s36 = scalar_lea.hbm %s1, %s35
      %s37 = sshll.u32 [#allocation6], 4
      %s38 = int_to_ptr.vmem [resolvable:$true] %s37
      %43 = dma.hbm_to_vmem [thread:$0]  %s36, 2048, %s38, [#allocation7], 128, 128, 8
    $region9: #{tpu_custom_call.1} parent=1 // pred_fallthru
      _
    // Predicated region
    $region10: #{tpu_custom_call.1} parent=1 // pred_check
      _
    $region11: #{tpu_custom_call.1} parent=1 // pred_check_branch
      %45 = sbr.rel (0) target = $region13
    $region12: #{tpu_custom_call.1} parent=1 // pred_region
      %46 = dma.done [#allocation4], 2048
    $region13: #{tpu_custom_call.1} parent=1 // pred_fallthru
      _
    // Predicated region
    $region14: #{tpu_custom_call.1} parent=1 // pred_check
      _
    $region15: #{tpu_custom_call.1} parent=1 // pred_check_branch
      %48 = sbr.rel (0) target = $region17
    $region16: #{tpu_custom_call.1} parent=1 // pred_region
      %49 = dma.done [#allocation7], 2048
    $region17: #{tpu_custom_call.1} parent=1 // pred_fallthru
      _
    %s50 = sadd.s32 0, 0
    %s51 = smul.u32 8, %s50
    %s52 = sadd.s32 0, 0
    %s53 = smul.u32 8, %s52
    %p54 = scmp.eq.s32.totalorder 0, 0
    // Predicated region
    $region18: #{tpu_custom_call.1} parent=1 // pred_check
      %p55 = pneg %p54
    $region19: #{tpu_custom_call.1} parent=1 // pred_check_branch
      %57 = sbr.rel (%p55) target = $region21
    $region20: #{tpu_custom_call.1} parent=1 // pred_region
      %vm58 = vcmask 130048
      %59 = vst.msk [vmem:[#allocation2] sm:$0xff] %vm58, 0.0
      %60 = vst.msk [vmem:[#allocation2 + $0x8] sm:$0xff] %vm58, 0.0
      %vm61 = vcmask 0
      %62 = vst.msk [vmem:[#allocation8] sm:$0x1] %vm61, 0.0
    $region21: #{tpu_custom_call.1} parent=1 // pred_fallthru
      _
    %v63 = vlaneseq
    %v64 = vshrl.u32 %v63, 7
    %v65 = vadd.s32 %v64, 8
    %v66 = vlaneseq
    %v67 = vand.u32 %v66, 127
    %vm68 = vcmp.eq.s32.totalorder %v64, 0
    %vm69 = vcmp.eq.s32.totalorder %v65, 0
    %vm70 = vcmp.eq.s32.totalorder %v64, 15
    %vm71 = vcmp.eq.s32.totalorder %v65, 15
    %vm72 = vcmp.eq.s32.totalorder %v67, 0
    %vm73 = vcmp.eq.s32.totalorder %v67, 15
    %v74 = vld [vmem:[#allocation2] sm:$0xff]
    %v75 = vld [vmem:[#allocation2 + $0x8] sm:$0xff]
    loop: start=0, step=1, limit=8
    $region22: #{tpu_custom_call.1} parent=1 // loop_pre_header
      _
    $region23: #{tpu_custom_call.1} parent=1 // loop_header
      %s77 = sphi 0, %s81
      %p78 = scmp.ge.s32.totalorder %s77, 8
      %v82 = vphi 0.0, %v190
      %v83 = vphi 0.0, %v191
    $region24: #{tpu_custom_call.1} parent=1 // loop_header_branch
      %80 = sbr.rel (%p78) target = $region28
    $region25: #{tpu_custom_call.1} parent=1 // loop_body
      %s84 = smul.u32 %s77, 16
      %s85 = scalar_lea.vmem [#allocation3], %s84
      %v86 = vld [vmem:[%s85] sm:$0xff]
      %v87 = vld [vmem:[%s85 + $0x8] sm:$0xff]
      %s88 = scalar_lea.vmem [#allocation6], %s84
      %v89 = vld [vmem:[%s88] sm:$0xff]
      %v90 = vld [vmem:[%s88 + $0x8] sm:$0xff]
      %v91 = vsub.f32 %v86, %v89
      %v92 = vsub.f32 %v87, %v90
      %v93 = vrot.slane %v91, 7
      %v94 = vrot.slane %v92, 7
      %vm95 = vcmp.lt.s32.totalorder %v64, 1
      %v96 = vsel %vm95, %v93, %v94
      %v97 = vsel %vm95, %v94, %v93
      %v98 = vsel %vm68, 0.0, %v97
      %v99 = vsel %vm69, 0.0, %v96
      %v100 = vrot.slane %v91, 1
      %v101 = vrot.slane %v92, 1
      %vm102 = vcmp.lt.s32.totalorder %v64, 7
      %v103 = vsel %vm102, %v100, %v101
      %v104 = vsel %vm102, %v101, %v100
      %v105 = vsel %vm70, 0.0, %v103
      %v106 = vsel %vm71, 0.0, %v104
      %v107 = vmul.f32 %v91, 2.0
      %v108 = vmul.f32 %v92, 2.0
      %v109 = vadd.f32 %v98, %v107
      %v110 = vadd.f32 %v99, %v108
      %v111 = vadd.f32 %v109, %v105
      %v112 = vadd.f32 %v110, %v106
      %v113 = vsub.f32 %v98, %v105
      %v114 = vsub.f32 %v99, %v106
      %vm115 = vcmask 1047680
      %116 = vrot.lane.b32.xlu0 %v111, 16
      %v117 = vpop.permute.xlu0 %116
      %v118 = vsel %vm115, %v117, %v111
      %119 = vrot.lane.b32.xlu0 %v112, 16
      %v120 = vpop.permute.xlu0 %119
      %v121 = vsel %vm115, %v120, %v112
      %122 = vrot.lane.b32.xlu0 %v118, 16
      %v123 = vpop.permute.xlu0 %122
      %124 = vrot.lane.b32.xlu0 %v121, 16
      %v125 = vpop.permute.xlu0 %124
      %v126 = vsel %vm115, %v123, %v111
      %v127 = vsel %vm115, %v125, %v112
      %130 = vrot.lane.b32.xlu0 %v126, 113
      %v131 = vpop.permute.xlu0 %130
      %132 = vrot.lane.b32.xlu0 %v127, 113
      %v133 = vpop.permute.xlu0 %132
      %v136 = vsel %vm72, 0.0, %v131
      %v137 = vsel %vm72, 0.0, %v133
      %138 = vrot.lane.b32.xlu0 %v126, 127
      %v139 = vpop.permute.xlu0 %138
      %140 = vrot.lane.b32.xlu0 %v127, 127
      %v141 = vpop.permute.xlu0 %140
      %v144 = vsel %vm73, 0.0, %v139
      %v145 = vsel %vm73, 0.0, %v141
      %146 = vrot.lane.b32.xlu0 %v113, 16
      %v147 = vpop.permute.xlu0 %146
      %v148 = vsel %vm115, %v147, %v113
      %149 = vrot.lane.b32.xlu0 %v114, 16
      %v150 = vpop.permute.xlu0 %149
      %v151 = vsel %vm115, %v150, %v114
      %152 = vrot.lane.b32.xlu0 %v148, 16
      %v153 = vpop.permute.xlu0 %152
      %154 = vrot.lane.b32.xlu0 %v151, 16
      %v155 = vpop.permute.xlu0 %154
      %v156 = vsel %vm115, %v153, %v113
      %v157 = vsel %vm115, %v155, %v114
      %160 = vrot.lane.b32.xlu0 %v156, 113
      %v161 = vpop.permute.xlu0 %160
      %162 = vrot.lane.b32.xlu0 %v157, 113
      %v163 = vpop.permute.xlu0 %162
      %v166 = vsel %vm72, 0.0, %v161
      %v167 = vsel %vm72, 0.0, %v163
      %168 = vrot.lane.b32.xlu0 %v156, 127
      %v169 = vpop.permute.xlu0 %168
      %170 = vrot.lane.b32.xlu0 %v157, 127
      %v171 = vpop.permute.xlu0 %170
      %v174 = vsel %vm73, 0.0, %v169
      %v175 = vsel %vm73, 0.0, %v171
      %v176 = vsub.f32 %v136, %v144
      %v177 = vsub.f32 %v137, %v145
      %v178 = vmul.f32 %v113, 2.0
      %v179 = vmul.f32 %v114, 2.0
      %v180 = vadd.f32 %v166, %v178
      %v181 = vadd.f32 %v167, %v179
      %v182 = vadd.f32 %v180, %v174
      %v183 = vadd.f32 %v181, %v175
      %v184 = vand.u32 2147483647, %v176
      %v185 = vand.u32 2147483647, %v177
      %v186 = vadd.f32 %v82, %v184
      %v187 = vadd.f32 %v83, %v185
      %v188 = vand.u32 2147483647, %v182
      %v189 = vand.u32 2147483647, %v183
      %v190 = vadd.f32 %v186, %v188
      %v191 = vadd.f32 %v187, %v189
    $region26: #{tpu_custom_call.1} parent=1 // loop_footer
      %s81 = sadd.s32 1, %s77
    $region27: #{tpu_custom_call.1} parent=1 // loop_footer_branch
      %76 = sbr.rel target = $region23
    $region28: #{tpu_custom_call.1} parent=1 // loop_exit
      _
    %v192 = vadd.f32 %v74, %v82
    %v193 = vadd.f32 %v75, %v83
    %vm194 = vcmask 130048
    %195 = vst.msk [vmem:[#allocation2] sm:$0xff] %vm194, %v192
    %196 = vst.msk [vmem:[#allocation2 + $0x8] sm:$0xff] %vm194, %v193
    // Predicated region
    $region29: #{tpu_custom_call.1} parent=1 // pred_check
      %p197 = pneg %p54
    $region30: #{tpu_custom_call.1} parent=1 // pred_check_branch
      %199 = sbr.rel (%p197) target = $region32
    $region31: #{tpu_custom_call.1} parent=1 // pred_region
      %v200 = vld [vmem:[#allocation8] sm:$0x1]
      %v201 = vld [vmem:[#allocation2] sm:$0xff]
      %v202 = vld [vmem:[#allocation2 + $0x8] sm:$0xff]
      %v203 = vsel %vm194, %v201, 0.0
      %v204 = vsel %vm194, %v202, 0.0
      %v205 = vadd.f32 %v203, %v204
      %206 = vadd.xlane.f32.xlu0 %v205
      %v207 = vpop.xlane.xlu0 %206
      %v208 = vrot.slane %v207, 4
      %v209 = vadd.f32 %v207, %v208
      %v210 = vrot.slane %v209, 2
      %v211 = vadd.f32 %v209, %v210
      %v212 = vrot.slane %v211, 1
      %v213 = vadd.f32 %v211, %v212
      %s214 = vtos %v213
      %v215 = vstv %s214
      %v216 = vadd.f32 %v200, %v215
      %vm217 = vcmask 0
      %218 = vst.msk [vmem:[#allocation8] sm:$0x1] %vm217, %v216
    $region32: #{tpu_custom_call.1} parent=1 // pred_fallthru
      _
    // Predicated region
    $region33: #{tpu_custom_call.1} parent=1 // pred_check
      _
    $region34: #{tpu_custom_call.1} parent=1 // pred_check_branch
      %220 = sbr.rel (0) target = $region36
    $region35: #{tpu_custom_call.1} parent=1 // pred_region
      %s222 = ssub.s32 16, 16
      %223 = vsyncadd [#allocation5], %s222
      %s225 = sshll.u32 [#allocation8], 4
      %s226 = int_to_ptr.vmem [resolvable:$true] %s225
      %228 = dma.vmem_to_hbm [thread:$0]  %s226, 16, %s2, [#allocation5]
    $region36: #{tpu_custom_call.1} parent=1 // pred_fallthru
      _
    // Predicated region
    $region37: #{tpu_custom_call.1} parent=1 // pred_check
      _
    $region38: #{tpu_custom_call.1} parent=1 // pred_check_branch
      %230 = sbr.rel (0) target = $region40
    $region39: #{tpu_custom_call.1} parent=1 // pred_region
      %231 = dma.done [#allocation5], 16
    $region40: #{tpu_custom_call.1} parent=1 // pred_fallthru
      _
    %232 = vsyncpa [#allocation4], 1
    %233 = vsyncpa [#allocation7], 1
    %234 = vsyncpa [#allocation5], 1

</llo_original>
